<compile_context>
chip_gen: v6e
topology: v6e:2x2x1
jax: 0.10.0
libtpu: 0.0.40
codegen_flags: <defaults>
</compile_context>

<pallas_src>
from functools import partial

import numpy as np
import jax
import jax.numpy as jnp
from jax.experimental import pallas as pl
from jax.experimental.pallas import tpu as pltpu


def _round_up(x, m):
    return (x + m - 1) // m * m


def _cdiv(a, b):
    return -(-a // b)


def make_stft_coeffs(fftsize, window_size):
    """Matches the torch module __init__: symmetric np.hamming-windowed DFT."""
    F = fftsize // 2 + 1
    win = np.hamming(window_size)                      # symmetric, like the module
    w = np.arange(F)[:, None]
    t = np.arange(window_size)[None, :]
    fcoef_r = np.cos(2.0 * np.pi * w * t / fftsize) * win[None, :]
    fcoef_i = -np.sin(2.0 * np.pi * w * t / fftsize) * win[None, :]
    return fcoef_r.astype(np.float32), fcoef_i.astype(np.float32)   # (F, W) each


def stft_kernel(sig_ref, coef_ref, out_ref, *, n_hops, compute_dtype):
    """Hop-decomposed framed matmul for one (batch row, frame tile).

    sig_ref : (n_chunks, stride)        f32 hop chunks of this batch row (resident)
    coef_ref: (n_hops, stride, F2_pad)  fused real|imag DFT coefficients
    out_ref : (tl, F2_pad)              f32 spectra for this frame tile
    """
    tl = out_ref.shape[0]
    i = pl.program_id(1)
    row0 = pl.multiple_of(i * tl, 8)          # tl is always a multiple of 8

    def hop_operand(h):
        # frames[m, h*stride:(h+1)*stride] == chunks[m + h, :]
        return sig_ref[pl.ds(row0 + h, tl), :].astype(compute_dtype)

    acc = jnp.dot(hop_operand(0), coef_ref[0], preferred_element_type=jnp.float32)
    for h in range(1, n_hops):                # static & tiny: ceil(W / stride)
        acc += jnp.dot(hop_operand(h), coef_ref[h],
                       preferred_element_type=jnp.float32)
    out_ref[...] = acc


@partial(jax.jit, static_argnums=(1, 2, 3, 4, 5))
def stft_forward(x, fftsize, window_size, stride, tile_frames=1024,
                 compute_dtype=jnp.bfloat16):
    """Forward of the torch STFT module: (B, 1, T) -> (B, L, F, 2) float32."""
    B, C, T = x.shape
    assert C == 1, "STFT expects a single input channel (B, 1, T)"
    F = fftsize // 2 + 1
    W = window_size
    F2 = 2 * F
    L = (T - W) // stride + 1
    assert L >= 1, "signal shorter than one window"
    n_hops = _cdiv(W, stride)
    W_ceil = n_hops * stride
    F2_pad = _round_up(F2, 128)
    coef_elem_bytes = np.dtype(compute_dtype).itemsize

    # ---- fused real|imag coefficients, hop-major: (n_hops, stride, F2_pad) ----
    coef_r, coef_i = make_stft_coeffs(fftsize, window_size)        # (F, W) each
    coef_np = np.zeros((W_ceil, F2_pad), np.float32)
    coef_np[:W, :F] = coef_r.T
    coef_np[:W, F:F2] = coef_i.T
    coef = jnp.asarray(coef_np.reshape(n_hops, stride, F2_pad)).astype(compute_dtype)
    coef_vmem = n_hops * _round_up(stride, 8) * F2_pad * coef_elem_bytes
    # v7x guard: don't double-buffer a large constant operand.
    single_buffer_coef = coef_vmem > (4 << 20)

    # ---- frame-tile planning (VMEM budget + v7x megacore when B == 1) ----
    def plan(tl):
        n_l = _cdiv(L, tl)
        L_pad = n_l * tl
        n_chunks = L_pad + n_hops - 1
        vmem = (2 * _round_up(n_chunks, 8) * _round_up(stride, 128) * 4   # signal row x2 bufs
                + (1 if single_buffer_coef else 2) * coef_vmem            # coefficients
                + 3 * _round_up(tl, 8) * F2_pad * 4)                      # out x2 bufs + acc
        return n_l, L_pad, n_chunks, vmem

    if B >= 2:
        tl = max(8, min(tile_frames, _round_up(L, 8)))
    else:
        # keep >= 2 grid steps so both v7x TensorCores get work
        tl = max(8, min(tile_frames, _round_up(_cdiv(L, 2), 8)))
    n_l, L_pad, n_chunks, vmem = plan(tl)
    while vmem > (40 << 20) and tl > 8:
        tl = max(8, _round_up(tl // 2, 8))
        n_l, L_pad, n_chunks, vmem = plan(tl)

    # ---- raw signal -> hop chunks (contiguous reshape; NO im2col, NO gather) ----
    sig = x[:, 0, :].astype(jnp.float32)
    needed = n_chunks * stride
    if needed <= T:
        sig = sig[:, :needed]
    else:
        sig = jnp.pad(sig, ((0, 0), (0, needed - T)))
    sig_chunks = sig.reshape(B, n_chunks, stride)

    if single_buffer_coef:
        coef_spec = pl.BlockSpec((n_hops, stride, F2_pad), lambda b, i: (0, 0, 0),
                                 pipeline_mode=pl.Buffered(1))
    else:
        coef_spec = pl.BlockSpec((n_hops, stride, F2_pad), lambda b, i: (0, 0, 0))

    cost = pl.CostEstimate(
        flops=2 * B * L_pad * W_ceil * F2_pad,
        transcendentals=0,
        bytes_accessed=4 * B * needed + coef_vmem + 4 * B * L_pad * F2_pad,
    )

    out_p = pl.pallas_call(
        partial(stft_kernel, n_hops=n_hops, compute_dtype=compute_dtype),
        out_shape=jax.ShapeDtypeStruct((B, L_pad, F2_pad), jnp.float32),
        grid_spec=pltpu.PrefetchScalarGridSpec(
            num_scalar_prefetch=0,
            grid=(B, n_l),
            in_specs=[
                # one batch row of hop chunks; index constant along the frame-tile
                # axis -> DMA'd once per batch element and kept resident in VMEM.
                pl.BlockSpec((None, n_chunks, stride), lambda b, i: (b, 0, 0)),
                coef_spec,
            ],
            out_specs=pl.BlockSpec((None, tl, F2_pad), lambda b, i: (b, i, 0)),
        ),
        compiler_params=pltpu.CompilerParams(
            dimension_semantics=("parallel", "parallel"),
            vmem_limit_bytes=int(min(max(vmem + (8 << 20), 32 << 20), 60 << 20)),
        ),
        cost_estimate=cost,
    )(sig_chunks, coef)

    # Slice off padding and emit the torch layout (B, L, F, 2):
    # torch: stack([spec_r, spec_i], -1) on (B, F, L), then permute(0, 2, 1, 3).
    # (Downstream Pallas consumers should prefer out_p's lane-dense (B, L_pad, 2F).)
    spec_r = out_p[:, :L, :F]
    spec_i = out_p[:, :L, F:F2]
    return jnp.stack([spec_r, spec_i], axis=-1)


if __name__ == "__main__":
    fftsize, window_size, stride = 32, 16, 8
    B, T = 2, 128

    key = jax.random.PRNGKey(0)
    x = jax.random.normal(key, (B, 1, T), dtype=jnp.float32)   # NCL, like torch Conv1d

    # Pure numpy reference of the torch forward (Conv1d as framed matmul).
    F = fftsize // 2 + 1
    W = window_size
    L = (T - W) // stride + 1
    coef_r, coef_i = make_stft_coeffs(fftsize, window_size)
    idx = np.arange(L)[:, None] * stride + np.arange(W)[None, :]
    frames = np.asarray(x)[:, 0, :][:, idx]                    # (B, L, W)
    ref_r = np.einsum("blw,fw->blf", frames, coef_r)
    ref_i = np.einsum("blw,fw->blf", frames, coef_i)
    ref = np.stack([ref_r, ref_i], axis=-1)                    # (B, L, F, 2)

    # Default path: bf16 MXU operands, f32 accumulation.
    out = jax.block_until_ready(stft_forward(x, fftsize, window_size, stride))
    assert out.shape == (B, L, F, 2), out.shape
    np.testing.assert_allclose(np.asarray(out), ref, rtol=2e-2, atol=1e-1)

    # Full-float32 path matches the torch float32 convs tightly.
    out32 = jax.block_until_ready(
        stft_forward(x, fftsize, window_size, stride, 1024, jnp.float32))
    np.testing.assert_allclose(np.asarray(out32), ref, rtol=1e-4, atol=1e-4)

    print("KERNEL_OK")
</pallas_src>

<mosaic_0001>
module attributes {stable_mosaic.version = 11 : i64} {
  func.func @stft_kernel(%arg0: i32, %arg1: i32, %arg2: memref<1x17x8xf32, #tpu.memory_space<vmem>>, %arg3: memref<2x8x128xbf16, #tpu.memory_space<vmem>>, %arg4: memref<1x16x128xf32, #tpu.memory_space<vmem>>) attributes {dimension_semantics = [#tpu.dimension_semantics<parallel>, #tpu.dimension_semantics<parallel>], iteration_bounds = array<i64: 2, 1>, scalar_prefetch = 0 : i64, scratch_operands = 0 : i64, tpu.core_type = #tpu.core_type<tc>, window_params = [{transform_indices = @transform_0, window_bounds = array<i64: 1, 17, 8>}, {pipeline_mode = #tpu.pipeline_mode<synchronous>, transform_indices = @transform_1, window_bounds = array<i64: 2, 8, 128>}, {transform_indices = @transform_2, window_bounds = array<i64: 1, 16, 128>}]} {
    %c16_i32 = arith.constant 16 : i32
    %0 = arith.muli %arg1, %c16_i32 : i32
    %1 = tpu.assume_multiple %0, 8 : i32
    %c0_i32 = arith.constant 0 : i32
    %2 = arith.addi %1, %c0_i32 : i32
    %c0 = arith.constant 0 : index
    %3 = arith.index_cast %2 : i32 to index
    %c0_0 = arith.constant 0 : index
    %4 = vector.load %arg2[%c0, %3, %c0_0] : memref<1x17x8xf32, #tpu.memory_space<vmem>>, vector<1x16x8xf32>
    %5 = vector.shape_cast %4 : vector<1x16x8xf32> to vector<16x8xf32>
    %6 = arith.truncf %5 : vector<16x8xf32> to vector<16x8xbf16>
    %c0_1 = arith.constant 0 : index
    %c0_2 = arith.constant 0 : index
    %c0_3 = arith.constant 0 : index
    %7 = vector.load %arg3[%c0_1, %c0_2, %c0_3] : memref<2x8x128xbf16, #tpu.memory_space<vmem>>, vector<1x8x128xbf16>
    %8 = vector.shape_cast %7 : vector<1x8x128xbf16> to vector<8x128xbf16>
    %cst = arith.constant dense<0.000000e+00> : vector<16x128xf32>
    %9 = tpu.matmul %6, %8, %cst {dimension_numbers = #tpu.dot_dimension_numbers<[1], [0], [0], [1], [0, 0, 1, 1], [], []>} : vector<16x8xbf16>, vector<8x128xbf16>, vector<16x128xf32> -> vector<16x128xf32>
    %c1_i32 = arith.constant 1 : i32
    %10 = arith.addi %1, %c1_i32 : i32
    %c0_4 = arith.constant 0 : index
    %11 = arith.index_cast %10 : i32 to index
    %c0_5 = arith.constant 0 : index
    %12 = vector.load %arg2[%c0_4, %11, %c0_5] : memref<1x17x8xf32, #tpu.memory_space<vmem>>, vector<1x16x8xf32>
    %13 = vector.shape_cast %12 : vector<1x16x8xf32> to vector<16x8xf32>
    %14 = arith.truncf %13 : vector<16x8xf32> to vector<16x8xbf16>
    %c1 = arith.constant 1 : index
    %c0_6 = arith.constant 0 : index
    %c0_7 = arith.constant 0 : index
    %15 = vector.load %arg3[%c1, %c0_6, %c0_7] : memref<2x8x128xbf16, #tpu.memory_space<vmem>>, vector<1x8x128xbf16>
    %16 = vector.shape_cast %15 : vector<1x8x128xbf16> to vector<8x128xbf16>
    %cst_8 = arith.constant dense<0.000000e+00> : vector<16x128xf32>
    %17 = tpu.matmul %14, %16, %cst_8 {dimension_numbers = #tpu.dot_dimension_numbers<[1], [0], [0], [1], [0, 0, 1, 1], [], []>} : vector<16x8xbf16>, vector<8x128xbf16>, vector<16x128xf32> -> vector<16x128xf32>
    %18 = arith.addf %9, %17 : vector<16x128xf32>
    %c0_9 = arith.constant 0 : index
    %c0_10 = arith.constant 0 : index
    %c0_11 = arith.constant 0 : index
    %19 = vector.load %arg4[%c0_9, %c0_10, %c0_11] : memref<1x16x128xf32, #tpu.memory_space<vmem>>, vector<1x16x128xf32>
    %20 = vector.shape_cast %19 : vector<1x16x128xf32> to vector<16x128xf32>
    %21 = vector.shape_cast %18 : vector<16x128xf32> to vector<1x16x128xf32>
    tpu.vector_store %arg4[%c0_9, %c0_10, %c0_11], %21 {strides = array<i32>} : memref<1x16x128xf32, #tpu.memory_space<vmem>>, vector<1x16x128xf32>,
    return
  }
  func.func @transform_0(%arg0: i32, %arg1: i32) -> (i32, i32, i32) {
    %c0_i32 = arith.constant 0 : i32
    %c0_i32_0 = arith.constant 0 : i32
    %c0_i32_1 = arith.constant 0 : i32
    return %arg0, %c0_i32, %c0_i32_0 : i32, i32, i32
  }
  func.func @transform_1(%arg0: i32, %arg1: i32) -> (i32, i32, i32) {
    %c0_i32 = arith.constant 0 : i32
    %c0_i32_0 = arith.constant 0 : i32
    %c0_i32_1 = arith.constant 0 : i32
    %c0_i32_2 = arith.constant 0 : i32
    return %c0_i32, %c0_i32_0, %c0_i32_1 : i32, i32, i32
  }
  func.func @transform_2(%arg0: i32, %arg1: i32) -> (i32, i32, i32) {
    %c0_i32 = arith.constant 0 : i32
    %c0_i32_0 = arith.constant 0 : i32
    return %arg0, %arg1, %c0_i32 : i32, i32, i32
  }
}

</mosaic_0001>

<llo_original>
// kernel: stft_forward.1
$region0: #{stft_forward.1}
  #allocation0 [shape = 'u32[]', space=smem, size = 0x4, offset = 0x4, fixed_abs, tag = 'smem constant byte address 0x4 - core index']
  #allocation1 [shape = 'u32[144,128]{1,0:T(1,128)}', space=vmem, size = 0x12000, scoped, tag = 'internal scratch']
  %s0 = inlined_call_operand.vmem [shape: f32[2,17,8], index: 0, kind: input, shape index: {}]
  %s1 = inlined_call_operand.vmem [shape: bf16[2,8,128], index: 1, kind: input, shape index: {}]
  %s2 = inlined_call_operand.vmem [shape: f32[2,16,128], index: 2, kind: output, shape index: {}]
  %s3 = sld [smem:[#allocation0]]
  $region41: #{stft_forward.1} parent=0
    _
  %s5 = ssub.s32 1, %s3
  %s6 = scalar_select 0, %s5, %s3
  loop: start=0, step=1, limit=4
  $region2: #{stft_forward.1} parent=0 // loop_pre_header
    _
  $region3: #{stft_forward.1} parent=0 // loop_header
    %s8 = sphi 0, %s12
    %p9 = scmp.ge.s32.totalorder %s8, 4
    %s15 = sphi 0, %s27
    %s16 = sphi 0, %s23
    %s17 = sphi 0, %s15
    %s18 = sphi 0, %s16
    %s19 = sphi 0, %s17
    %s20 = sphi 0, %s18
    %s30 = sphi 0, %s32
    %s33 = sphi 0, %s30
    %s34 = sphi 0, %s33
    %s50 = sphi 0, %s34
    %s54 = sphi 0, %s54
    %s56 = sphi 0, %s54
    %s57 = sphi 0, %s56
    %s71 = sphi 0, %s57
    %s79 = sphi 0, %s81
    %s82 = sphi 0, %s79
    %s83 = sphi 0, %s82
    %s99 = sphi 0, %s83
  $region4: #{stft_forward.1} parent=0 // loop_header_branch
    %11 = sbr.rel (%p9) target = $region8
  $region5: #{stft_forward.1} parent=0 // loop_body
    %s13 = ssub.s32 %s8, 1
    %s14 = ssub.s32 %s8, 2
    %s21 = sadd.s32 1, %s16
    %p22 = scmp.ge.s32.totalorder %s21, 1
    %s23 = scalar_select %p22, 0, %s21
    %s24 = sadd.s32 1, %s15
    %s25 = scalar_select %p22, %s24, %s15
    %p26 = scmp.ge.s32.totalorder %s25, 2
    %s27 = scalar_select %p26, 0, %s25
    %s28 = ssub.s32 %s15, %s27
    %p29 = scmp.eq.s32.totalorder %s28, 0
    %s31 = sadd.s32 %s30, 1
    %s32 = scalar_select %p29, %s30, %s31
    %p35 = pneg %p29
    %p36 = scmp.eq.s32.totalorder %s8, 1
    %p37 = por %p35, %p36
    %p38 = scmp.ne.s32.totalorder %s30, %s33
    %p39 = scmp.eq.s32.totalorder %s8, 0
    %p40 = por %p38, %p39
    %p41 = scmp.ne.s32.totalorder %s30, %s33
    %p42 = scmp.eq.s32.totalorder %s13, 1
    %p43 = por %p41, %p42
    %p44 = scmp.ne.s32.totalorder %s33, %s34
    %p45 = scmp.eq.s32.totalorder %s13, 0
    %p46 = por %p44, %p45
    %p47 = scmp.ne.s32.totalorder %s33, %s34
    %p48 = scmp.eq.s32.totalorder %s14, 1
    %p49 = por %p47, %p48
    %p51 = scmp.ne.s32.totalorder %s34, %s50
    %p52 = scmp.eq.s32.totalorder %s14, 0
    %p53 = por %p51, %p52
    %s55 = sadd.s32 %s54, 1
    %p58 = scmp.eq.s32.totalorder %s8, 1
    %p59 = scmp.ne.s32.totalorder %s54, %s56
    %p60 = scmp.eq.s32.totalorder %s8, 0
    %p61 = por %p59, %p60
    %p62 = scmp.ne.s32.totalorder %s54, %s56
    %p63 = scmp.eq.s32.totalorder %s13, 1
    %p64 = por %p62, %p63
    %p65 = scmp.ne.s32.totalorder %s56, %s57
    %p66 = scmp.eq.s32.totalorder %s13, 0
    %p67 = por %p65, %p66
    %p68 = scmp.ne.s32.totalorder %s56, %s57
    %p69 = scmp.eq.s32.totalorder %s14, 1
    %p70 = por %p68, %p69
    %p72 = scmp.ne.s32.totalorder %s57, %s71
    %p73 = scmp.eq.s32.totalorder %s14, 0
    %p74 = por %p72, %p73
    %s75 = ssub.s32 %s15, %s27
    %s76 = ssub.s32 %s16, %s23
    %s77 = sor.u32 %s75, %s76
    %p78 = scmp.eq.s32.totalorder %s77, 0
    %s80 = sadd.s32 %s79, 1
    %s81 = scalar_select %p78, %s79, %s80
    %p84 = pneg %p78
    %p85 = scmp.eq.s32.totalorder %s8, 1
    %p86 = por %p84, %p85
    %p87 = scmp.ne.s32.totalorder %s79, %s82
    %p88 = scmp.eq.s32.totalorder %s8, 0
    %p89 = por %p87, %p88
    %p90 = scmp.ne.s32.totalorder %s79, %s82
    %p91 = scmp.eq.s32.totalorder %s13, 1
    %p92 = por %p90, %p91
    %p93 = scmp.ne.s32.totalorder %s82, %s83
    %p94 = scmp.eq.s32.totalorder %s13, 0
    %p95 = por %p93, %p94
    %p96 = scmp.ne.s32.totalorder %s82, %s83
    %p97 = scmp.eq.s32.totalorder %s14, 1
    %p98 = por %p96, %p97
    %p100 = scmp.ne.s32.totalorder %s83, %s99
    %p101 = scmp.eq.s32.totalorder %s14, 0
    %p102 = por %p100, %p101
    %p103 = scmp.le.s32.totalorder 1, %s8
    %p104 = scmp.lt.s32.totalorder %s8, 3
    %p105 = pnand %p103, %p104
    %p106 = pneg %p105
    // Predicated region
    $region9: #{stft_forward.1} parent=5 // pred_check
      _
    $region10: #{stft_forward.1} parent=5 // pred_check_branch
      %108 = sbr.rel (%p105) target = $region12
    $region11: #{stft_forward.1} parent=5 // pred_region
      %s109 = ssub.s32 %s8, 1
      // Predicated region
      $region13: #{stft_forward.1} parent=11 // pred_check
        %p110 = pneg %p67
      $region14: #{stft_forward.1} parent=11 // pred_check_branch
        %112 = sbr.rel (%p110) target = $region16
      $region15: #{stft_forward.1} parent=11 // pred_region
        _
      $region16: #{stft_forward.1} parent=11 // pred_fallthru
        _
    $region12: #{stft_forward.1} parent=5 // pred_fallthru
      _
    %p113 = scmp.lt.s32.totalorder %s8, 2
    // Predicated region
    $region17: #{stft_forward.1} parent=5 // pred_check
      %p114 = pneg %p113
    $region18: #{stft_forward.1} parent=5 // pred_check_branch
      %116 = sbr.rel (%p114) target = $region20
    $region19: #{stft_forward.1} parent=5 // pred_region
      // Predicated region
      $region21: #{stft_forward.1} parent=19 // pred_check
        %p117 = pneg %p40
      $region22: #{stft_forward.1} parent=19 // pred_check_branch
        %119 = sbr.rel (%p117) target = $region24
      $region23: #{stft_forward.1} parent=19 // pred_region
        %p120 = scmp.lt.s32.totalorder %s15, 1
        %s121 = scalar_select %p120, %s15, 1
        %s122 = smul.addr %s121, 3
        %s123 = smul.addr %s122, 8
        %s124 = scalar_lea.vmem %s0, %s123
      $region24: #{stft_forward.1} parent=19 // pred_fallthru
        _
    $region20: #{stft_forward.1} parent=5 // pred_fallthru
      _
    %p125 = scmp.le.s32.totalorder 1, %s8
    %p126 = scmp.lt.s32.totalorder %s8, 3
    %p127 = pnand %p125, %p126
    %p128 = pneg %p127
    // Predicated region
    $region25: #{stft_forward.1} parent=5 // pred_check
      _
    $region26: #{stft_forward.1} parent=5 // pred_check_branch
      %130 = sbr.rel (%p127) target = $region28
    $region27: #{stft_forward.1} parent=5 // pred_region
      %s131 = ssub.s32 %s8, 1
      %p132 = scmp.lt.s32.totalorder %s17, 1
      %s133 = scalar_select %p132, %s17, 1
      %s134 = smul.addr %s133, 3
      %s135 = smul.addr %s134, 8
      %s136 = scalar_lea.vmem %s0, %s135
      %p137 = pneg %p46
      %p138 = pneg %p43
      %p139 = pneg %p67
      %p140 = pneg %p64
      %p141 = pneg %p95
      %p142 = pneg %p92
      %s143 = smul.u32 2, %s18
      %p144 = scmp.lt.s32.totalorder %s17, 1
      %s145 = scalar_select %p144, %s17, 1
      %p146 = scmp.lt.s32.totalorder %s143, 1
      %s147 = scalar_select %p146, %s143, 1
      %s148 = smul.addr %s145, 2
      %s149 = sadd.s32 %s147, %s148
      %s150 = smul.addr %s149, 8
      %s151 = scalar_lea.vmem %s2, %s150
      %p152 = scmp.lt.s32.totalorder %s17, 1
      %s153 = scalar_select %p152, %s17, 1
      %s154 = smul.addr %s153, 3
      %s155 = smul.addr %s154, 8
      %s156 = scalar_lea.vmem %s0, %s155
      %s157 = smul.u32 2, %s18
      %p158 = scmp.lt.s32.totalorder %s17, 1
      %s159 = scalar_select %p158, %s17, 1
      %p160 = scmp.lt.s32.totalorder %s157, 1
      %s161 = scalar_select %p160, %s157, 1
      %s162 = smul.addr %s159, 2
      %s163 = sadd.s32 %s161, %s162
      %s164 = smul.addr %s163, 8
      %s165 = scalar_lea.vmem %s2, %s164
      %s166 = smul.u32 2, %s18
      %s168 = smul.u32 %s18, 16
      %s169 = scalar_lea.vmem %s156, %s168
      %v170 = vld [vmem:[%s169] sm:$0xff]
      %v171 = vld [vmem:[%s169 + $0x8] sm:$0xff]
      %v172 = vpack.c.bf16 %v171, %v170
      %v173 = vld [vmem:[%s1] sm:$0xf]
      %s174 = sadd.s32 %s168, 1
      %s175 = scalar_lea.vmem %s156, %s174
      %v176 = vld [vmem:[%s175] sm:$0xff]
      %v177 = vld [vmem:[%s175 + $0x8] sm:$0xff]
      %v178 = vpack.c.bf16 %v177, %v176
      %s179 = scalar_lea.vmem %s1, 4
      %v180 = vld [vmem:[%s179] sm:$0xf]
      %vm181 = vcmask 64512
      %v183 = vsel %vm181, %v178, 0
      %vm185 = vcmask 1043456
      %v187 = vsel %vm185, %v180, 0
      %189 = vmatprep.subr.bf16.mxu0 0
      %190 = vmatpush1.bf16.msra.mxu0 0
      %191 = vmatprep.subr.bf16.mxu0 0
      %192 = vmatpush1.bf16.msra.mxu0 0
      %193 = vmatprep.subr.bf16.mxu0 0
      %194 = vmatpush1.bf16.msra.mxu0 0
      %195 = vmatprep.subr.bf16.mxu0 0
      %196 = vmatpush1.bf16.msra.mxu0 0
      %197 = vmatprep.subr.bf16.mxu0 0
      %198 = vmatpush1.bf16.msra.mxu0 0
      %199 = vmatprep.subr.bf16.mxu0 0
      %200 = vmatpush1.bf16.msra.mxu0 0
      %201 = vmatprep.subr.bf16.mxu0 0
      %202 = vmatpush1.bf16.msra.mxu0 0
      %203 = vmatprep.subr.bf16.mxu0 0
      %204 = vmatpush1.bf16.msra.mxu0 %v187
      %205 = vmatprep.subr.bf16.mxu0 0
      %206 = vmatpush2.bf16.msra.mxu0 0
      %207 = vmatprep.subr.bf16.mxu0 0
      %208 = vmatpush2.bf16.msra.mxu0 0
      %209 = vmatprep.subr.bf16.mxu0 0
      %210 = vmatpush2.bf16.msra.mxu0 0
      %211 = vmatprep.subr.bf16.mxu0 0
      %212 = vmatpush2.bf16.msra.mxu0 0
      %213 = vmatprep.subr.bf16.mxu0 0
      %214 = vmatpush2.bf16.msra.mxu0 0
      %215 = vmatprep.subr.bf16.mxu0 0
      %216 = vmatpush2.bf16.msra.mxu0 0
      %217 = vmatprep.subr.bf16.mxu0 0
      %218 = vmatpush2.bf16.msra.mxu0 0
      %219 = vmatprep.subr.bf16.mxu0 0
      %220 = vmatpush2.bf16.msra.mxu0 0
      %221 = vmatprep.mubr.bf16.mxu0 0
      %222 = vmatmul.mubr.bf16.gmra.mxu0 %v183
      %v223 = vpop.f32.mrf.mxu0
      %v224 = vadd.f32 0.0, %v223
      %v225 = vpop.f32.mrf.mxu0
      %v226 = vpop.f32.mrf.mxu0
      %v227 = vadd.f32 0.0, %v226
      %v228 = vpop.f32.mrf.mxu0
      %229 = vdwg.mxu0
      %v231 = vsel %vm181, %v172, 0
      %v234 = vsel %vm185, %v173, 0
      %236 = vmatprep.subr.bf16.mxu0 0
      %237 = vmatpush1.bf16.msra.mxu0 0
      %238 = vmatprep.subr.bf16.mxu0 0
      %239 = vmatpush1.bf16.msra.mxu0 0
      %240 = vmatprep.subr.bf16.mxu0 0
      %241 = vmatpush1.bf16.msra.mxu0 0
      %242 = vmatprep.subr.bf16.mxu0 0
      %243 = vmatpush1.bf16.msra.mxu0 0
      %244 = vmatprep.subr.bf16.mxu0 0
      %245 = vmatpush1.bf16.msra.mxu0 0
      %246 = vmatprep.subr.bf16.mxu0 0
      %247 = vmatpush1.bf16.msra.mxu0 0
      %248 = vmatprep.subr.bf16.mxu0 0
      %249 = vmatpush1.bf16.msra.mxu0 0
      %250 = vmatprep.subr.bf16.mxu0 0
      %251 = vmatpush1.bf16.msra.mxu0 %v234
      %252 = vmatprep.subr.bf16.mxu0 0
      %253 = vmatpush2.bf16.msra.mxu0 0
      %254 = vmatprep.subr.bf16.mxu0 0
      %255 = vmatpush2.bf16.msra.mxu0 0
      %256 = vmatprep.subr.bf16.mxu0 0
      %257 = vmatpush2.bf16.msra.mxu0 0
      %258 = vmatprep.subr.bf16.mxu0 0
      %259 = vmatpush2.bf16.msra.mxu0 0
      %260 = vmatprep.subr.bf16.mxu0 0
      %261 = vmatpush2.bf16.msra.mxu0 0
      %262 = vmatprep.subr.bf16.mxu0 0
      %263 = vmatpush2.bf16.msra.mxu0 0
      %264 = vmatprep.subr.bf16.mxu0 0
      %265 = vmatpush2.bf16.msra.mxu0 0
      %266 = vmatprep.subr.bf16.mxu0 0
      %267 = vmatpush2.bf16.msra.mxu0 0
      %268 = vmatprep.mubr.bf16.mxu0 0
      %269 = vmatmul.mubr.bf16.gmra.mxu0 %v231
      %v270 = vpop.f32.mrf.mxu0
      %v271 = vadd.f32 %v224, %v270
      %v272 = vpop.f32.mrf.mxu0
      %v273 = vpop.f32.mrf.mxu0
      %v274 = vadd.f32 %v227, %v273
      %v275 = vpop.f32.mrf.mxu0
      %276 = vdwg.mxu0
      %277 = vst [vmem:[%s165] sm:$0xff] %v271
      %278 = vst [vmem:[%s165 + $0x8] sm:$0xff] %v274
      %s279 = smul.u32 2, %s18
      %p280 = scmp.lt.s32.totalorder %s17, 1
      %s281 = scalar_select %p280, %s17, 1
      %p282 = scmp.lt.s32.totalorder %s279, 1
      %s283 = scalar_select %p282, %s279, 1
      %s284 = smul.addr %s281, 2
      %s285 = sadd.s32 %s283, %s284
      %s286 = smul.addr %s285, 8
      %s287 = scalar_lea.vmem %s2, %s286
      // Predicated region
      $region29: #{stft_forward.1} parent=27 // pred_check
        %p288 = pneg %p92
      $region30: #{stft_forward.1} parent=27 // pred_check_branch
        %290 = sbr.rel (%p288) target = $region32
      $region31: #{stft_forward.1} parent=27 // pred_region
        %s291 = smul.u32 2, %s18
      $region32: #{stft_forward.1} parent=27 // pred_fallthru
        _
    $region28: #{stft_forward.1} parent=5 // pred_fallthru
      _
    %p292 = scmp.le.s32.totalorder 2, %s8
    // Predicated region
    $region33: #{stft_forward.1} parent=5 // pred_check
      %p293 = pneg %p292
    $region34: #{stft_forward.1} parent=5 // pred_check_branch
      %295 = sbr.rel (%p293) target = $region36
    $region35: #{stft_forward.1} parent=5 // pred_region
      %s296 = ssub.s32 %s8, 2
      // Predicated region
      $region37: #{stft_forward.1} parent=35 // pred_check
        %p297 = pneg %p98
      $region38: #{stft_forward.1} parent=35 // pred_check_branch
        %299 = sbr.rel (%p297) target = $region40
      $region39: #{stft_forward.1} parent=35 // pred_region
        %s300 = smul.u32 2, %s20
        %p301 = scmp.lt.s32.totalorder %s19, 1
        %s302 = scalar_select %p301, %s19, 1
        %p303 = scmp.lt.s32.totalorder %s300, 1
        %s304 = scalar_select %p303, %s300, 1
        %s305 = smul.addr %s302, 2
        %s306 = sadd.s32 %s304, %s305
        %s307 = smul.addr %s306, 8
        %s308 = scalar_lea.vmem %s2, %s307
      $region40: #{stft_forward.1} parent=35 // pred_fallthru
        _
    $region36: #{stft_forward.1} parent=5 // pred_fallthru
      _
  $region6: #{stft_forward.1} parent=0 // loop_footer
    %s12 = sadd.s32 1, %s8
  $region7: #{stft_forward.1} parent=0 // loop_footer_branch
    %7 = sbr.rel target = $region3
  $region8: #{stft_forward.1} parent=0 // loop_exit
    _

</llo_original>
